<compile_context>
chip_gen: v7x
topology: tpu7x:2x2x1
jax: 0.10.0
libtpu: 0.0.40
codegen_flags: <defaults>
</compile_context>

<pallas_src>
import functools

import jax
import jax.numpy as jnp
import numpy as np
from jax.experimental import pallas as pl
from jax.experimental.pallas import tpu as pltpu


_VMEM_LIMIT = 32 * 1024 * 1024   # safe on v5e/v6e/v7x; can be raised to 48-64 MiB on v6e


def _single_buffered(block_shape, index_map):
    """BlockSpec for grid-invariant operands: never re-fetched -> 1 buffer."""
    return pl.BlockSpec(block_shape, index_map,
                        pipeline_mode=pl.Buffered(buffer_count=1))


def _pick_hw_tile(HW, target=1024):
    """Largest lane-dense (multiple-of-128) tile <= target that divides HW."""
    if HW <= target or HW % 128 != 0:
        return HW                      # single full block (block dim == array dim is legal)
    t = target - (target % 128)
    while HW % t != 0:
        t -= 128
    return t


# ----------------------------------------------------------------------------
# Specialized 1x1 / padding=0 kernel (the configuration reYNet.encoder4 uses).
# ----------------------------------------------------------------------------
def _make_1x1_kernel(K):
    def kernel(att_sref, x_ref, w_ref, b_ref, o_ref, aggw_ref, aggb_ref):
        b = pl.program_id(0)

        # Expert aggregation: once per sample, K scalar FMAs on the VPU
        # (attention scalars from SMEM, f32 accumulate), cached in persistent
        # VMEM scratch across the HW tiles of this sample.
        @pl.when(pl.program_id(1) == 0)
        def _aggregate():
            a = att_sref[b, 0]
            agg_w = a * w_ref[0].astype(jnp.float32)          # (Cout, Cin)
            agg_b = a * b_ref[0]                              # (Cout, 1)
            for k in range(1, K):
                a = att_sref[b, k]
                agg_w = agg_w + a * w_ref[k].astype(jnp.float32)
                agg_b = agg_b + a * b_ref[k]
            aggw_ref[...] = agg_w.astype(jnp.bfloat16)
            aggb_ref[...] = agg_b

        # 1x1 conv == (Cout,Cin)@(Cin,T) bf16 MXU matmul, f32 accumulation.
        # (Cout, T) output is lane-dense and already NCHW-flat.
        out = jnp.dot(aggw_ref[...], x_ref[0],
                      preferred_element_type=jnp.float32)
        o_ref[0] = (out + aggb_ref[...]).astype(o_ref.dtype)

    return kernel


def _cond_conv_1x1(x2_bf16, att, w_stack, b_stack):
    bs, Cin, HW = x2_bf16.shape
    K, Cout, _ = w_stack.shape
    T = _pick_hw_tile(HW)

    return pl.pallas_call(
        _make_1x1_kernel(K),
        out_shape=jax.ShapeDtypeStruct((bs, Cout, HW), jnp.float32),
        grid_spec=pltpu.PrefetchScalarGridSpec(
            num_scalar_prefetch=1,                            # att -> SMEM
            grid=(bs, HW // T),
            in_specs=[
                pl.BlockSpec((1, Cin, T), lambda b, t, att_r: (b, 0, t)),
                _single_buffered((K, Cout, Cin), lambda b, t, att_r: (0, 0, 0)),
                _single_buffered((K, Cout, 1), lambda b, t, att_r: (0, 0, 0)),
            ],
            out_specs=pl.BlockSpec((1, Cout, T), lambda b, t, att_r: (b, 0, t)),
            scratch_shapes=[
                pltpu.VMEM((Cout, Cin), jnp.bfloat16),        # aggregated weight
                pltpu.VMEM((Cout, 1), jnp.float32),           # aggregated bias
            ],
        ),
        compiler_params=pltpu.CompilerParams(
            dimension_semantics=("parallel", "arbitrary"),
            vmem_limit_bytes=_VMEM_LIMIT,
        ),
    )(att, x2_bf16, w_stack, b_stack)


# ----------------------------------------------------------------------------
# General odd-ks / "same"-padding kernel (stride=1, groups=1), channels-first.
# ----------------------------------------------------------------------------
def _make_general_kernel(H, W, Cin, Cout, ks, K):
    HW = H * W
    pad = (ks - 1) // 2

    def kernel(att_sref, x_ref, w_ref, b_ref, m_ref, o_ref, col_ref):
        b = pl.program_id(0)

        # Expert aggregation: K scalar FMAs on the VPU (f32 accumulate).
        a = att_sref[b, 0]
        agg_w = a * w_ref[0].astype(jnp.float32)              # (Cout, ks*ks*Cin)
        agg_b = a * b_ref[0]                                  # (Cout, 1)
        for k in range(1, K):
            a = att_sref[b, k]
            agg_w = agg_w + a * w_ref[k].astype(jnp.float32)
            agg_b = agg_b + a * b_ref[k]
        agg_w = agg_w.astype(jnp.bfloat16)

        # im2col via XLU lane rolls + precomputed 0/1 tap masks (channels on
        # sublanes, HW on lanes): no halo buffer, no strided per-tap relayouts.
        x = x_ref[0].astype(jnp.float32)                      # (Cin, HW)
        for kh in range(ks):
            for kw in range(ks):
                off = (kh - pad) * W + (kw - pad)             # static shift per tap
                shifted = x if off == 0 else pltpu.roll(x, shift=(-off) % HW, axis=1)
                t = kh * ks + kw
                col_ref[t * Cin:(t + 1) * Cin, :] = shifted * m_ref[t:t + 1, :]

        # Single deep MXU contraction -> (Cout, HW), lane-dense and NCHW-flat.
        out = jnp.dot(agg_w, col_ref[...].astype(jnp.bfloat16),
                      preferred_element_type=jnp.float32)
        o_ref[0] = (out + agg_b).astype(o_ref.dtype)

    return kernel


def _cond_conv_general(x2_bf16, att, w_cols, b_stack, H, W, ks):
    bs, Cin, HW = x2_bf16.shape
    K, Cout, _ = w_cols.shape
    taps = ks * ks
    pad = (ks - 1) // 2

    # Per-tap validity masks (compile-time constants, single-buffered input).
    masks = np.zeros((taps, H, W), np.float32)
    for kh in range(ks):
        for kw in range(ks):
            dh, dw = kh - pad, kw - pad
            masks[kh * ks + kw,
                  max(0, -dh):min(H, H - dh),
                  max(0, -dw):min(W, W - dw)] = 1.0
    masks = jnp.asarray(masks.reshape(taps, HW))

    return pl.pallas_call(
        _make_general_kernel(H, W, Cin, Cout, ks, K),
        out_shape=jax.ShapeDtypeStruct((bs, Cout, HW), jnp.float32),
        grid_spec=pltpu.PrefetchScalarGridSpec(
            num_scalar_prefetch=1,                            # att -> SMEM
            grid=(bs,),
            in_specs=[
                pl.BlockSpec((1, Cin, HW), lambda b, att_r: (b, 0, 0)),
                _single_buffered((K, Cout, taps * Cin), lambda b, att_r: (0, 0, 0)),
                _single_buffered((K, Cout, 1), lambda b, att_r: (0, 0, 0)),
                _single_buffered((taps, HW), lambda b, att_r: (0, 0)),
            ],
            out_specs=pl.BlockSpec((1, Cout, HW), lambda b, att_r: (b, 0, 0)),
            scratch_shapes=[pltpu.VMEM((taps * Cin, HW), jnp.float32)],   # im2col
        ),
        compiler_params=pltpu.CompilerParams(
            dimension_semantics=("parallel",),
            vmem_limit_bytes=_VMEM_LIMIT,
        ),
    )(att, x2_bf16, w_cols, b_stack, masks)


# ----------------------------------------------------------------------------
# Parameter prep (once) + public forward (mirrors CondConv.forward).
# ----------------------------------------------------------------------------
def prepare_cond_conv_params(assign_w, weight, bias):
    """One-time parameter formatting (layout + bf16 cast).  Call once and reuse;
    doing the transpose/cast per forward would be a full HBM copy each call."""
    K, Cout, Cin, ks, _ = weight.shape
    if ks == 1:
        w_fmt = weight[:, :, :, 0, 0].astype(jnp.bfloat16)            # (K, Cout, Cin)
    else:
        # (K,Cout,Cin,kh,kw) -> (K,Cout,kh,kw,Cin) -> (K,Cout,ks*ks*Cin) to match
        # the kernel's im2col row order (tap-major, then channel).
        w_fmt = jnp.transpose(weight, (0, 1, 3, 4, 2)).reshape(
            K, Cout, ks * ks * Cin).astype(jnp.bfloat16)
    return {
        "assign_w": jnp.asarray(assign_w, jnp.float32),               # (K, Cin)
        "w": w_fmt,
        "b": jnp.asarray(bias, jnp.float32).reshape(K, Cout, 1),      # (K, Cout, 1)
    }


@functools.partial(jax.jit, static_argnames=("kernel_size", "padding", "stride"))
def cond_conv_forward(x_nchw, params, *, kernel_size, padding=0, stride=1):
    """CondConv forward.  x_nchw: (bs, Cin, H, W) f32.  Returns (bs, Cout, H, W) f32."""
    assert stride == 1, "TODO(synk): stride > 1 not implemented"
    bs, Cin, H, W = x_nchw.shape
    K, Cout, _ = params["b"].shape
    ks = kernel_size
    HW = H * W

    # One bf16 activation slab shared by the GAP (attention) and the conv
    # kernel; NCHW -> (bs, Cin, HW) is a free reshape.  In a bf16 network the
    # cast fuses into the producer and costs nothing extra.
    x2 = x_nchw.reshape(bs, Cin, HW).astype(jnp.bfloat16)

    # Assignment module: GAP -> 1x1 matvec (no bias) -> sigmoid.  Tiny; stays
    # in plain JAX because the spatially-tiled kernel needs the attention
    # before the first HW tile of a sample.
    mean = jnp.mean(x2, axis=2, dtype=jnp.float32)                    # (bs, Cin)
    att = jax.nn.sigmoid(mean @ params["assign_w"].T)                 # (bs, K)

    if ks == 1 and padding == 0:
        out = _cond_conv_1x1(x2, att, params["w"], params["b"])
    else:
        assert ks % 2 == 1 and padding == (ks - 1) // 2, (
            "general path assumes 'same' output size "
            "(required by CondConv's final .view(bs, out, h, w))")
        out = _cond_conv_general(x2, att, params["w"], params["b"], H, W, ks)

    return out.reshape(bs, Cout, H, W)                                # free reshape


# ----------------------------------------------------------------------------
# Pure-JAX reference mirroring the PyTorch CondConv.forward semantics (f32).
# ----------------------------------------------------------------------------
def _reference_forward(x, assign_w, weight, bias, padding):
    bs, Cin, H, W = x.shape
    K, Cout, _, ks, _ = weight.shape
    att = jax.nn.sigmoid(jnp.mean(x, axis=(2, 3)) @ assign_w.T)          # (bs, K)
    agg_w = (att @ weight.reshape(K, -1)).reshape(bs, Cout, Cin, ks, ks)
    agg_b = att @ bias                                                   # (bs, Cout)

    def one(xi, wi, bi):
        y = jax.lax.conv_general_dilated(
            xi[None], wi, window_strides=(1, 1),
            padding=[(padding, padding), (padding, padding)],
            dimension_numbers=("NCHW", "OIHW", "NCHW"))[0]
        return y + bi[:, None, None]

    return jax.vmap(one)(x, agg_w, agg_b)


if __name__ == "__main__":
    key = jax.random.PRNGKey(0)
    # bf16 MXU operands / bf16-rounded attention with f32 accumulation.
    ATOL, RTOL = 5e-2, 5e-2

    # ---- Test 1: exact reYNet usage -----------------------------------------
    # encoder4 = CondConv(4*features, 4*features, kernel_size=1, stride=1),
    # default init_features=32 -> 128 channels; small 16x16 spatial tile.
    bs, C, H, W, K = 2, 128, 16, 16, 4
    k1, k2, k3, k4, key = jax.random.split(key, 5)
    x = jax.random.normal(k1, (bs, C, H, W), jnp.float32)
    assign_w = jax.random.normal(k2, (K, C), jnp.float32) * float(np.sqrt(2.0 / K))
    bound = float(np.sqrt(6.0 / C))
    weight = jax.random.uniform(k3, (K, C, C, 1, 1), jnp.float32,
                                minval=-bound, maxval=bound)
    bias = jax.random.normal(k4, (K, C), jnp.float32)

    params = prepare_cond_conv_params(assign_w, weight, bias)
    out = jax.block_until_ready(
        cond_conv_forward(x, params, kernel_size=1, padding=0))
    ref = _reference_forward(x, assign_w, weight, bias, 0)
    assert out.shape == (bs, C, H, W), out.shape
    np.testing.assert_allclose(np.asarray(out), np.asarray(ref), atol=ATOL, rtol=RTOL)

    # ---- Test 2: general 3x3 "same" CondConv (roll/im2col path) -------------
    bs, Cin, Cout, H, W, ks, K = 2, 8, 16, 16, 16, 3, 4
    padding = (ks - 1) // 2
    k1, k2, k3, k4, key = jax.random.split(key, 5)
    x = jax.random.normal(k1, (bs, Cin, H, W), jnp.float32)
    assign_w = jax.random.normal(k2, (K, Cin), jnp.float32) * float(np.sqrt(2.0 / K))
    bound = float(np.sqrt(6.0 / (Cin * ks * ks)))
    weight = jax.random.uniform(k3, (K, Cout, Cin, ks, ks), jnp.float32,
                                minval=-bound, maxval=bound)
    bias = jax.random.normal(k4, (K, Cout), jnp.float32)

    params = prepare_cond_conv_params(assign_w, weight, bias)
    out = jax.block_until_ready(
        cond_conv_forward(x, params, kernel_size=ks, padding=padding))
    ref = _reference_forward(x, assign_w, weight, bias, padding)
    assert out.shape == (bs, Cout, H, W), out.shape
    np.testing.assert_allclose(np.asarray(out), np.asarray(ref), atol=ATOL, rtol=RTOL)

    print("KERNEL_OK")
</pallas_src>

<mosaic_0001>
module attributes {stable_mosaic.version = 11 : i64} {
  func.func @kernel(%arg0: i32, %arg1: i32, %arg2: memref<2x4xf32, #tpu.memory_space<smem>>, %arg3: memref<1x128x256xbf16, #tpu.memory_space<vmem>>, %arg4: memref<4x128x128xbf16, #tpu.memory_space<vmem>>, %arg5: memref<4x128x1xf32, #tpu.memory_space<vmem>>, %arg6: memref<1x128x256xf32, #tpu.memory_space<vmem>>, %arg7: memref<128x128xbf16, #tpu.memory_space<vmem>>, %arg8: memref<128x1xf32, #tpu.memory_space<vmem>>) attributes {dimension_semantics = [#tpu.dimension_semantics<parallel>, #tpu.dimension_semantics<arbitrary>], iteration_bounds = array<i64: 2, 1>, scalar_prefetch = 1 : i64, scratch_operands = 2 : i64, tpu.core_type = #tpu.core_type<tc>, window_params = [{transform_indices = @transform_0, window_bounds = array<i64: 1, 128, 256>}, {pipeline_mode = #tpu.pipeline_mode<synchronous>, transform_indices = @transform_1, window_bounds = array<i64: 4, 128, 128>}, {pipeline_mode = #tpu.pipeline_mode<synchronous>, transform_indices = @transform_2, window_bounds = array<i64: 4, 128, 1>}, {transform_indices = @transform_3, window_bounds = array<i64: 1, 128, 256>}]} {
    %c0_i32 = arith.constant 0 : i32
    %0 = arith.cmpi eq, %arg1, %c0_i32 : i32
    %1 = arith.extui %0 : i1 to i32
    %c0_i32_0 = arith.constant 0 : i32
    %2 = arith.cmpi ne, %1, %c0_i32_0 : i32
    scf.if %2 {
      %13 = arith.index_cast %arg0 : i32 to index
      %c0_10 = arith.constant 0 : index
      %14 = memref.load %arg2[%13, %c0_10] : memref<2x4xf32, #tpu.memory_space<smem>>
      %c0_11 = arith.constant 0 : index
      %c0_12 = arith.constant 0 : index
      %c0_13 = arith.constant 0 : index
      %15 = vector.load %arg4[%c0_11, %c0_12, %c0_13] : memref<4x128x128xbf16, #tpu.memory_space<vmem>>, vector<1x128x128xbf16>
      %16 = vector.shape_cast %15 : vector<1x128x128xbf16> to vector<128x128xbf16>
      %17 = arith.extf %16 : vector<128x128xbf16> to vector<128x128xf32>
      %18 = vector.broadcast %14 : f32 to vector<128x128xf32>
      %19 = arith.mulf %18, %17 : vector<128x128xf32>
      %c0_14 = arith.constant 0 : index
      %c0_15 = arith.constant 0 : index
      %c0_16 = arith.constant 0 : index
      %20 = vector.load %arg5[%c0_14, %c0_15, %c0_16] : memref<4x128x1xf32, #tpu.memory_space<vmem>>, vector<1x128x1xf32>
      %21 = vector.shape_cast %20 : vector<1x128x1xf32> to vector<128x1xf32>
      %22 = vector.broadcast %14 : f32 to vector<128x1xf32>
      %23 = arith.mulf %22, %21 : vector<128x1xf32>
      %24 = arith.index_cast %arg0 : i32 to index
      %c1 = arith.constant 1 : index
      %25 = memref.load %arg2[%24, %c1] : memref<2x4xf32, #tpu.memory_space<smem>>
      %c1_17 = arith.constant 1 : index
      %c0_18 = arith.constant 0 : index
      %c0_19 = arith.constant 0 : index
      %26 = vector.load %arg4[%c1_17, %c0_18, %c0_19] : memref<4x128x128xbf16, #tpu.memory_space<vmem>>, vector<1x128x128xbf16>
      %27 = vector.shape_cast %26 : vector<1x128x128xbf16> to vector<128x128xbf16>
      %28 = arith.extf %27 : vector<128x128xbf16> to vector<128x128xf32>
      %29 = vector.broadcast %25 : f32 to vector<128x128xf32>
      %30 = arith.mulf %29, %28 : vector<128x128xf32>
      %31 = arith.addf %19, %30 : vector<128x128xf32>
      %c1_20 = arith.constant 1 : index
      %c0_21 = arith.constant 0 : index
      %c0_22 = arith.constant 0 : index
      %32 = vector.load %arg5[%c1_20, %c0_21, %c0_22] : memref<4x128x1xf32, #tpu.memory_space<vmem>>, vector<1x128x1xf32>
      %33 = vector.shape_cast %32 : vector<1x128x1xf32> to vector<128x1xf32>
      %34 = vector.broadcast %25 : f32 to vector<128x1xf32>
      %35 = arith.mulf %34, %33 : vector<128x1xf32>
      %36 = arith.addf %23, %35 : vector<128x1xf32>
      %37 = arith.index_cast %arg0 : i32 to index
      %c2 = arith.constant 2 : index
      %38 = memref.load %arg2[%37, %c2] : memref<2x4xf32, #tpu.memory_space<smem>>
      %c2_23 = arith.constant 2 : index
      %c0_24 = arith.constant 0 : index
      %c0_25 = arith.constant 0 : index
      %39 = vector.load %arg4[%c2_23, %c0_24, %c0_25] : memref<4x128x128xbf16, #tpu.memory_space<vmem>>, vector<1x128x128xbf16>
      %40 = vector.shape_cast %39 : vector<1x128x128xbf16> to vector<128x128xbf16>
      %41 = arith.extf %40 : vector<128x128xbf16> to vector<128x128xf32>
      %42 = vector.broadcast %38 : f32 to vector<128x128xf32>
      %43 = arith.mulf %42, %41 : vector<128x128xf32>
      %44 = arith.addf %31, %43 : vector<128x128xf32>
      %c2_26 = arith.constant 2 : index
      %c0_27 = arith.constant 0 : index
      %c0_28 = arith.constant 0 : index
      %45 = vector.load %arg5[%c2_26, %c0_27, %c0_28] : memref<4x128x1xf32, #tpu.memory_space<vmem>>, vector<1x128x1xf32>
      %46 = vector.shape_cast %45 : vector<1x128x1xf32> to vector<128x1xf32>
      %47 = vector.broadcast %38 : f32 to vector<128x1xf32>
      %48 = arith.mulf %47, %46 : vector<128x1xf32>
      %49 = arith.addf %36, %48 : vector<128x1xf32>
      %50 = arith.index_cast %arg0 : i32 to index
      %c3 = arith.constant 3 : index
      %51 = memref.load %arg2[%50, %c3] : memref<2x4xf32, #tpu.memory_space<smem>>
      %c3_29 = arith.constant 3 : index
      %c0_30 = arith.constant 0 : index
      %c0_31 = arith.constant 0 : index
      %52 = vector.load %arg4[%c3_29, %c0_30, %c0_31] : memref<4x128x128xbf16, #tpu.memory_space<vmem>>, vector<1x128x128xbf16>
      %53 = vector.shape_cast %52 : vector<1x128x128xbf16> to vector<128x128xbf16>
      %54 = arith.extf %53 : vector<128x128xbf16> to vector<128x128xf32>
      %55 = vector.broadcast %51 : f32 to vector<128x128xf32>
      %56 = arith.mulf %55, %54 : vector<128x128xf32>
      %57 = arith.addf %44, %56 : vector<128x128xf32>
      %c3_32 = arith.constant 3 : index
      %c0_33 = arith.constant 0 : index
      %c0_34 = arith.constant 0 : index
      %58 = vector.load %arg5[%c3_32, %c0_33, %c0_34] : memref<4x128x1xf32, #tpu.memory_space<vmem>>, vector<1x128x1xf32>
      %59 = vector.shape_cast %58 : vector<1x128x1xf32> to vector<128x1xf32>
      %60 = vector.broadcast %51 : f32 to vector<128x1xf32>
      %61 = arith.mulf %60, %59 : vector<128x1xf32>
      %62 = arith.addf %49, %61 : vector<128x1xf32>
      %63 = arith.truncf %57 : vector<128x128xf32> to vector<128x128xbf16>
      %c0_35 = arith.constant 0 : index
      %c0_36 = arith.constant 0 : index
      %64 = vector.load %arg7[%c0_35, %c0_36] : memref<128x128xbf16, #tpu.memory_space<vmem>>, vector<128x128xbf16>
      tpu.vector_store %arg7[%c0_35, %c0_36], %63 {strides = array<i32>} : memref<128x128xbf16, #tpu.memory_space<vmem>>, vector<128x128xbf16>,
      %c0_37 = arith.constant 0 : index
      %c0_38 = arith.constant 0 : index
      %65 = vector.load %arg8[%c0_37, %c0_38] : memref<128x1xf32, #tpu.memory_space<vmem>>, vector<128x1xf32>
      tpu.vector_store %arg8[%c0_37, %c0_38], %62 {strides = array<i32>} : memref<128x1xf32, #tpu.memory_space<vmem>>, vector<128x1xf32>,
    } else {
    }
    %c0 = arith.constant 0 : index
    %c0_1 = arith.constant 0 : index
    %3 = vector.load %arg7[%c0, %c0_1] : memref<128x128xbf16, #tpu.memory_space<vmem>>, vector<128x128xbf16>
    %c0_2 = arith.constant 0 : index
    %c0_3 = arith.constant 0 : index
    %c0_4 = arith.constant 0 : index
    %4 = vector.load %arg3[%c0_2, %c0_3, %c0_4] : memref<1x128x256xbf16, #tpu.memory_space<vmem>>, vector<1x128x256xbf16>
    %5 = vector.shape_cast %4 : vector<1x128x256xbf16> to vector<128x256xbf16>
    %cst = arith.constant dense<0.000000e+00> : vector<128x256xf32>
    %6 = tpu.matmul %3, %5, %cst {dimension_numbers = #tpu.dot_dimension_numbers<[1], [0], [0], [1], [0, 0, 1, 1], [], []>} : vector<128x128xbf16>, vector<128x256xbf16>, vector<128x256xf32> -> vector<128x256xf32>
    %c0_5 = arith.constant 0 : index
    %c0_6 = arith.constant 0 : index
    %7 = vector.load %arg8[%c0_5, %c0_6] : memref<128x1xf32, #tpu.memory_space<vmem>>, vector<128x1xf32>
    %8 = vector.broadcast %7 : vector<128x1xf32> to vector<128x256xf32>
    %9 = arith.addf %6, %8 : vector<128x256xf32>
    %c0_7 = arith.constant 0 : index
    %c0_8 = arith.constant 0 : index
    %c0_9 = arith.constant 0 : index
    %10 = vector.load %arg6[%c0_7, %c0_8, %c0_9] : memref<1x128x256xf32, #tpu.memory_space<vmem>>, vector<1x128x256xf32>
    %11 = vector.shape_cast %10 : vector<1x128x256xf32> to vector<128x256xf32>
    %12 = vector.shape_cast %9 : vector<128x256xf32> to vector<1x128x256xf32>
    tpu.vector_store %arg6[%c0_7, %c0_8, %c0_9], %12 {strides = array<i32>} : memref<1x128x256xf32, #tpu.memory_space<vmem>>, vector<1x128x256xf32>,
    return
  }
  func.func @transform_0(%arg0: i32, %arg1: i32, %arg2: memref<2x4xf32, #tpu.memory_space<smem>>) -> (i32, i32, i32) {
    %c0_i32 = arith.constant 0 : i32
    %c0_i32_0 = arith.constant 0 : i32
    return %arg0, %c0_i32, %arg1 : i32, i32, i32
  }
  func.func @transform_1(%arg0: i32, %arg1: i32, %arg2: memref<2x4xf32, #tpu.memory_space<smem>>) -> (i32, i32, i32) {
    %c0_i32 = arith.constant 0 : i32
    %c0_i32_0 = arith.constant 0 : i32
    %c0_i32_1 = arith.constant 0 : i32
    %c0_i32_2 = arith.constant 0 : i32
    return %c0_i32, %c0_i32_0, %c0_i32_1 : i32, i32, i32
  }
  func.func @transform_2(%arg0: i32, %arg1: i32, %arg2: memref<2x4xf32, #tpu.memory_space<smem>>) -> (i32, i32, i32) {
    %c0_i32 = arith.constant 0 : i32
    %c0_i32_0 = arith.constant 0 : i32
    %c0_i32_1 = arith.constant 0 : i32
    %c0_i32_2 = arith.constant 0 : i32
    return %c0_i32, %c0_i32_0, %c0_i32_1 : i32, i32, i32
  }
  func.func @transform_3(%arg0: i32, %arg1: i32, %arg2: memref<2x4xf32, #tpu.memory_space<smem>>) -> (i32, i32, i32) {
    %c0_i32 = arith.constant 0 : i32
    %c0_i32_0 = arith.constant 0 : i32
    return %arg0, %c0_i32, %arg1 : i32, i32, i32
  }
}

</mosaic_0001>

<llo_original>
// kernel: cond_conv_forward.1
$region0: #{cond_conv_forward.1}
  #allocation0 [shape = 'u32[]', space=smem, size = 0x4, offset = 0x4, fixed_abs, tag = 'smem constant byte address 0x4 - core index']
  #allocation1 [shape = 'u32[144,128]{1,0:T(1,128)}', space=vmem, size = 0x12000, scoped, tag = 'internal scratch']
  #allocation2 [shape = 'bf16[128,128]{1,0:T(16,128)(2,1)}', space=vmem, size = 0x8000, scoped, tag = 'scratch operand']
  #allocation3 [shape = 'f32[128,1]{1,0:T(8,128)}', space=vmem, size = 0x10000, scoped, tag = 'scratch operand']
  #allocation4 [shape = 's32[1]{0}', space=sflag, size = 0x4, scoped, tag = 'scoped memory for cond_conv_forward.1']
  #allocation5 [shape = 'u8[1024]{0}', space=smem, size = 0x400, scoped, tag = 'prefetched SMEM operand 0']
  %s0 = inlined_call_operand.vmem [shape: f32[2,4], index: 0, kind: input, shape index: {}]
  %s1 = inlined_call_operand.vmem [shape: bf16[2,128,256], index: 1, kind: input, shape index: {}]
  %s2 = inlined_call_operand.vmem [shape: bf16[4,128,128], index: 2, kind: input, shape index: {}]
  %s3 = inlined_call_operand.vmem [shape: f32[4,128,1], index: 3, kind: input, shape index: {}]
  %s4 = inlined_call_operand.vmem [shape: f32[2,128,256], index: 4, kind: output, shape index: {}]
  %s5 = sld [smem:[#allocation0]]
  $region49: #{cond_conv_forward.1} parent=0
    _
  %s7 = ssub.s32 1, %s5
  %s8 = scalar_select 0, %s7, %s5
  %s9 = sshll.u32 %s0, 4
  %s10 = int_to_ptr.vmem [resolvable:$true] %s9
  %12 = dma.vmem_to_smem %s10, 32, [#allocation5], [#allocation4]
  %13 = dma.done [#allocation4], 32
  %14 = sfence
  loop: start=0, step=1, limit=4
  $region2: #{cond_conv_forward.1} parent=0 // loop_pre_header
    _
  $region3: #{cond_conv_forward.1} parent=0 // loop_header
    %s16 = sphi 0, %s20
    %p17 = scmp.ge.s32.totalorder %s16, 4
    %s23 = sphi 0, %s35
    %s24 = sphi 0, %s31
    %s25 = sphi 0, %s23
    %s26 = sphi 0, %s24
    %s27 = sphi 0, %s25
    %s28 = sphi 0, %s26
    %s40 = sphi 0, %s42
    %s43 = sphi 0, %s40
    %s44 = sphi 0, %s43
    %s60 = sphi 0, %s44
    %s64 = sphi 0, %s64
    %s66 = sphi 0, %s64
    %s67 = sphi 0, %s66
    %s81 = sphi 0, %s67
    %s85 = sphi 0, %s85
    %s87 = sphi 0, %s85
    %s88 = sphi 0, %s87
    %s102 = sphi 0, %s88
    %s110 = sphi 0, %s112
    %s113 = sphi 0, %s110
    %s114 = sphi 0, %s113
    %s130 = sphi 0, %s114
  $region4: #{cond_conv_forward.1} parent=0 // loop_header_branch
    %19 = sbr.rel (%p17) target = $region8
  $region5: #{cond_conv_forward.1} parent=0 // loop_body
    %s21 = ssub.s32 %s16, 1
    %s22 = ssub.s32 %s16, 2
    %s29 = sadd.s32 1, %s24
    %p30 = scmp.ge.s32.totalorder %s29, 1
    %s31 = scalar_select %p30, 0, %s29
    %s32 = sadd.s32 1, %s23
    %s33 = scalar_select %p30, %s32, %s23
    %p34 = scmp.ge.s32.totalorder %s33, 2
    %s35 = scalar_select %p34, 0, %s33
    %s36 = ssub.s32 %s23, %s35
    %s37 = ssub.s32 %s24, %s31
    %s38 = sor.u32 %s36, %s37
    %p39 = scmp.eq.s32.totalorder %s38, 0
    %s41 = sadd.s32 %s40, 1
    %s42 = scalar_select %p39, %s40, %s41
    %p45 = pneg %p39
    %p46 = scmp.eq.s32.totalorder %s16, 1
    %p47 = por %p45, %p46
    %p48 = scmp.ne.s32.totalorder %s40, %s43
    %p49 = scmp.eq.s32.totalorder %s16, 0
    %p50 = por %p48, %p49
    %p51 = scmp.ne.s32.totalorder %s40, %s43
    %p52 = scmp.eq.s32.totalorder %s21, 1
    %p53 = por %p51, %p52
    %p54 = scmp.ne.s32.totalorder %s43, %s44
    %p55 = scmp.eq.s32.totalorder %s21, 0
    %p56 = por %p54, %p55
    %p57 = scmp.ne.s32.totalorder %s43, %s44
    %p58 = scmp.eq.s32.totalorder %s22, 1
    %p59 = por %p57, %p58
    %p61 = scmp.ne.s32.totalorder %s44, %s60
    %p62 = scmp.eq.s32.totalorder %s22, 0
    %p63 = por %p61, %p62
    %s65 = sadd.s32 %s64, 1
    %p68 = scmp.eq.s32.totalorder %s16, 1
    %p69 = scmp.ne.s32.totalorder %s64, %s66
    %p70 = scmp.eq.s32.totalorder %s16, 0
    %p71 = por %p69, %p70
    %p72 = scmp.ne.s32.totalorder %s64, %s66
    %p73 = scmp.eq.s32.totalorder %s21, 1
    %p74 = por %p72, %p73
    %p75 = scmp.ne.s32.totalorder %s66, %s67
    %p76 = scmp.eq.s32.totalorder %s21, 0
    %p77 = por %p75, %p76
    %p78 = scmp.ne.s32.totalorder %s66, %s67
    %p79 = scmp.eq.s32.totalorder %s22, 1
    %p80 = por %p78, %p79
    %p82 = scmp.ne.s32.totalorder %s67, %s81
    %p83 = scmp.eq.s32.totalorder %s22, 0
    %p84 = por %p82, %p83
    %s86 = sadd.s32 %s85, 1
    %p89 = scmp.eq.s32.totalorder %s16, 1
    %p90 = scmp.ne.s32.totalorder %s85, %s87
    %p91 = scmp.eq.s32.totalorder %s16, 0
    %p92 = por %p90, %p91
    %p93 = scmp.ne.s32.totalorder %s85, %s87
    %p94 = scmp.eq.s32.totalorder %s21, 1
    %p95 = por %p93, %p94
    %p96 = scmp.ne.s32.totalorder %s87, %s88
    %p97 = scmp.eq.s32.totalorder %s21, 0
    %p98 = por %p96, %p97
    %p99 = scmp.ne.s32.totalorder %s87, %s88
    %p100 = scmp.eq.s32.totalorder %s22, 1
    %p101 = por %p99, %p100
    %p103 = scmp.ne.s32.totalorder %s88, %s102
    %p104 = scmp.eq.s32.totalorder %s22, 0
    %p105 = por %p103, %p104
    %s106 = ssub.s32 %s23, %s35
    %s107 = ssub.s32 %s24, %s31
    %s108 = sor.u32 %s106, %s107
    %p109 = scmp.eq.s32.totalorder %s108, 0
    %s111 = sadd.s32 %s110, 1
    %s112 = scalar_select %p109, %s110, %s111
    %p115 = pneg %p109
    %p116 = scmp.eq.s32.totalorder %s16, 1
    %p117 = por %p115, %p116
    %p118 = scmp.ne.s32.totalorder %s110, %s113
    %p119 = scmp.eq.s32.totalorder %s16, 0
    %p120 = por %p118, %p119
    %p121 = scmp.ne.s32.totalorder %s110, %s113
    %p122 = scmp.eq.s32.totalorder %s21, 1
    %p123 = por %p121, %p122
    %p124 = scmp.ne.s32.totalorder %s113, %s114
    %p125 = scmp.eq.s32.totalorder %s21, 0
    %p126 = por %p124, %p125
    %p127 = scmp.ne.s32.totalorder %s113, %s114
    %p128 = scmp.eq.s32.totalorder %s22, 1
    %p129 = por %p127, %p128
    %p131 = scmp.ne.s32.totalorder %s114, %s130
    %p132 = scmp.eq.s32.totalorder %s22, 0
    %p133 = por %p131, %p132
    %p134 = scmp.le.s32.totalorder 1, %s16
    %p135 = scmp.lt.s32.totalorder %s16, 3
    %p136 = pnand %p134, %p135
    %p137 = pneg %p136
    // Predicated region
    $region9: #{cond_conv_forward.1} parent=5 // pred_check
      _
    $region10: #{cond_conv_forward.1} parent=5 // pred_check_branch
      %139 = sbr.rel (%p136) target = $region12
    $region11: #{cond_conv_forward.1} parent=5 // pred_region
      %s140 = ssub.s32 %s16, 1
      // Predicated region
      $region13: #{cond_conv_forward.1} parent=11 // pred_check
        %p141 = pneg %p77
      $region14: #{cond_conv_forward.1} parent=11 // pred_check_branch
        %143 = sbr.rel (%p141) target = $region16
      $region15: #{cond_conv_forward.1} parent=11 // pred_region
        _
      $region16: #{cond_conv_forward.1} parent=11 // pred_fallthru
        _
      // Predicated region
      $region17: #{cond_conv_forward.1} parent=11 // pred_check
        %p144 = pneg %p98
      $region18: #{cond_conv_forward.1} parent=11 // pred_check_branch
        %146 = sbr.rel (%p144) target = $region20
      $region19: #{cond_conv_forward.1} parent=11 // pred_region
        _
      $region20: #{cond_conv_forward.1} parent=11 // pred_fallthru
        _
    $region12: #{cond_conv_forward.1} parent=5 // pred_fallthru
      _
    %p147 = scmp.lt.s32.totalorder %s16, 2
    // Predicated region
    $region21: #{cond_conv_forward.1} parent=5 // pred_check
      %p148 = pneg %p147
    $region22: #{cond_conv_forward.1} parent=5 // pred_check_branch
      %150 = sbr.rel (%p148) target = $region24
    $region23: #{cond_conv_forward.1} parent=5 // pred_region
      // Predicated region
      $region25: #{cond_conv_forward.1} parent=23 // pred_check
        %p151 = pneg %p50
      $region26: #{cond_conv_forward.1} parent=23 // pred_check_branch
        %153 = sbr.rel (%p151) target = $region28
      $region27: #{cond_conv_forward.1} parent=23 // pred_region
        %s154 = smul.u32 2, %s24
        %p155 = scmp.lt.s32.totalorder %s23, 1
        %s156 = scalar_select %p155, %s23, 1
        %p157 = scmp.lt.s32.totalorder %s154, 1
        %s158 = scalar_select %p157, %s154, 1
        %s159 = smul.addr %s156, 32
        %s160 = sadd.s32 %s158, %s159
        %s161 = smul.addr %s160, 4
        %s162 = scalar_lea.vmem %s1, %s161
        %s163 = smul.u32 2, %s24
      $region28: #{cond_conv_forward.1} parent=23 // pred_fallthru
        _
    $region24: #{cond_conv_forward.1} parent=5 // pred_fallthru
      _
    %p164 = scmp.le.s32.totalorder 1, %s16
    %p165 = scmp.lt.s32.totalorder %s16, 3
    %p166 = pnand %p164, %p165
    %p167 = pneg %p166
    // Predicated region
    $region29: #{cond_conv_forward.1} parent=5 // pred_check
      _
    $region30: #{cond_conv_forward.1} parent=5 // pred_check_branch
      %169 = sbr.rel (%p166) target = $region32
    $region31: #{cond_conv_forward.1} parent=5 // pred_region
      %s170 = ssub.s32 %s16, 1
      %s171 = smul.u32 2, %s26
      %p172 = scmp.lt.s32.totalorder %s25, 1
      %s173 = scalar_select %p172, %s25, 1
      %p174 = scmp.lt.s32.totalorder %s171, 1
      %s175 = scalar_select %p174, %s171, 1
      %s176 = smul.addr %s173, 32
      %s177 = sadd.s32 %s175, %s176
      %s178 = smul.addr %s177, 4
      %s179 = scalar_lea.vmem %s1, %s178
      %p180 = pneg %p56
      %p181 = pneg %p53
      %p182 = pneg %p77
      %p183 = pneg %p74
      %p184 = pneg %p98
      %p185 = pneg %p95
      %p186 = pneg %p126
      %p187 = pneg %p123
      %s188 = smul.u32 2, %s26
      %p189 = scmp.lt.s32.totalorder %s25, 1
      %s190 = scalar_select %p189, %s25, 1
      %p191 = scmp.lt.s32.totalorder %s188, 1
      %s192 = scalar_select %p191, %s188, 1
      %s193 = smul.addr %s190, 32
      %s194 = sadd.s32 %s192, %s193
      %s195 = smul.addr %s194, 8
      %s196 = scalar_lea.vmem %s4, %s195
      %s197 = smul.u32 2, %s26
      %p198 = scmp.lt.s32.totalorder %s25, 1
      %s199 = scalar_select %p198, %s25, 1
      %p200 = scmp.lt.s32.totalorder %s197, 1
      %s201 = scalar_select %p200, %s197, 1
      %s202 = smul.addr %s199, 32
      %s203 = sadd.s32 %s201, %s202
      %s204 = smul.addr %s203, 4
      %s205 = scalar_lea.vmem %s1, %s204
      %s206 = smul.u32 2, %s26
      %s207 = smul.u32 2, %s26
      %p208 = scmp.lt.s32.totalorder %s25, 1
      %s209 = scalar_select %p208, %s25, 1
      %p210 = scmp.lt.s32.totalorder %s207, 1
      %s211 = scalar_select %p210, %s207, 1
      %s212 = smul.addr %s209, 32
      %s213 = sadd.s32 %s211, %s212
      %s214 = smul.addr %s213, 8
      %s215 = scalar_lea.vmem %s4, %s214
      %s216 = smul.u32 2, %s26
      %p218 = scmp.eq.s32.totalorder %s26, 0
      // Predicated region
      $region33: #{cond_conv_forward.1} parent=31 // pred_check
        %p219 = pneg %p218
      $region34: #{cond_conv_forward.1} parent=31 // pred_check_branch
        %221 = sbr.rel (%p219) target = $region36
      $region35: #{cond_conv_forward.1} parent=31 // pred_region
        %s222 = smul.u32 %s25, 128
        %s223 = sld [smem:[#allocation5 + %s222]]
        %v224 = vld [vmem:[%s2] sm:$0xf]
        %v225 = vld [vmem:[%s2 + $0x4] sm:$0xf]
        %v226 = vld [vmem:[%s2 + $0x8] sm:$0xf]
        %v227 = vld [vmem:[%s2 + $0xc] sm:$0xf]
        %v228 = vld [vmem:[%s2 + $0x10] sm:$0xf]
        %v229 = vld [vmem:[%s2 + $0x14] sm:$0xf]
        %v230 = vld [vmem:[%s2 + $0x18] sm:$0xf]
        %v231 = vld [vmem:[%s2 + $0x1c] sm:$0xf]
        %v232 = vld [vmem:[%s2 + $0x20] sm:$0xf]
        %v233 = vld [vmem:[%s2 + $0x24] sm:$0xf]
        %v234 = vld [vmem:[%s2 + $0x28] sm:$0xf]
        %v235 = vld [vmem:[%s2 + $0x2c] sm:$0xf]
        %v236 = vld [vmem:[%s2 + $0x30] sm:$0xf]
        %v237 = vld [vmem:[%s2 + $0x34] sm:$0xf]
        %v238 = vld [vmem:[%s2 + $0x38] sm:$0xf]
        %v239 = vld [vmem:[%s2 + $0x3c] sm:$0xf]
        %v240 = vunpack.c.l.bf16 %v224
        %v241 = vunpack.c.l.bf16 %v225
        %v242 = vunpack.c.l.bf16 %v226
        %v243 = vunpack.c.l.bf16 %v227
        %v244 = vunpack.c.l.bf16 %v228
        %v245 = vunpack.c.l.bf16 %v229
        %v246 = vunpack.c.l.bf16 %v230
        %v247 = vunpack.c.l.bf16 %v231
        %v248 = vunpack.c.l.bf16 %v232
        %v249 = vunpack.c.l.bf16 %v233
        %v250 = vunpack.c.l.bf16 %v234
        %v251 = vunpack.c.l.bf16 %v235
        %v252 = vunpack.c.l.bf16 %v236
        %v253 = vunpack.c.l.bf16 %v237
        %v254 = vunpack.c.l.bf16 %v238
        %v255 = vunpack.c.l.bf16 %v239
        %v256 = vstv %s223
        %v257 = vmul.f32 %v256, %v240
        %v258 = vmul.f32 %v256, %v241
        %v259 = vmul.f32 %v256, %v242
        %v260 = vmul.f32 %v256, %v243
        %v261 = vmul.f32 %v256, %v244
        %v262 = vmul.f32 %v256, %v245
        %v263 = vmul.f32 %v256, %v246
        %v264 = vmul.f32 %v256, %v247
        %v265 = vmul.f32 %v256, %v248
        %v266 = vmul.f32 %v256, %v249
        %v267 = vmul.f32 %v256, %v250
        %v268 = vmul.f32 %v256, %v251
        %v269 = vmul.f32 %v256, %v252
        %v270 = vmul.f32 %v256, %v253
        %v271 = vmul.f32 %v256, %v254
        %v272 = vmul.f32 %v256, %v255
        %v273 = vld [vmem:[%s3] sm:$0xff]
        %v274 = vld [vmem:[%s3 + $0x8] sm:$0xff]
        %v275 = vld [vmem:[%s3 + $0x10] sm:$0xff]
        %v276 = vld [vmem:[%s3 + $0x18] sm:$0xff]
        %v277 = vld [vmem:[%s3 + $0x20] sm:$0xff]
        %v278 = vld [vmem:[%s3 + $0x28] sm:$0xff]
        %v279 = vld [vmem:[%s3 + $0x30] sm:$0xff]
        %v280 = vld [vmem:[%s3 + $0x38] sm:$0xff]
        %v281 = vld [vmem:[%s3 + $0x40] sm:$0xff]
        %v282 = vld [vmem:[%s3 + $0x48] sm:$0xff]
        %v283 = vld [vmem:[%s3 + $0x50] sm:$0xff]
        %v284 = vld [vmem:[%s3 + $0x58] sm:$0xff]
        %v285 = vld [vmem:[%s3 + $0x60] sm:$0xff]
        %v286 = vld [vmem:[%s3 + $0x68] sm:$0xff]
        %v287 = vld [vmem:[%s3 + $0x70] sm:$0xff]
        %v288 = vld [vmem:[%s3 + $0x78] sm:$0xff]
        %v289 = vmul.f32 %v256, %v273
        %v290 = vmul.f32 %v256, %v274
        %v291 = vmul.f32 %v256, %v275
        %v292 = vmul.f32 %v256, %v276
        %v293 = vmul.f32 %v256, %v277
        %v294 = vmul.f32 %v256, %v278
        %v295 = vmul.f32 %v256, %v279
        %v296 = vmul.f32 %v256, %v280
        %v297 = vmul.f32 %v256, %v281
        %v298 = vmul.f32 %v256, %v282
        %v299 = vmul.f32 %v256, %v283
        %v300 = vmul.f32 %v256, %v284
        %v301 = vmul.f32 %v256, %v285
        %v302 = vmul.f32 %v256, %v286
        %v303 = vmul.f32 %v256, %v287
        %v304 = vmul.f32 %v256, %v288
        %s305 = sadd.s32 %s222, 1
        %s306 = sld [smem:[#allocation5 + %s305]]
        %s307 = scalar_lea.vmem %s2, 64
        %v308 = vld [vmem:[%s307] sm:$0xf]
        %v309 = vld [vmem:[%s307 + $0x4] sm:$0xf]
        %v310 = vld [vmem:[%s307 + $0x8] sm:$0xf]
        %v311 = vld [vmem:[%s307 + $0xc] sm:$0xf]
        %v312 = vld [vmem:[%s307 + $0x10] sm:$0xf]
        %v313 = vld [vmem:[%s307 + $0x14] sm:$0xf]
        %v314 = vld [vmem:[%s307 + $0x18] sm:$0xf]
        %v315 = vld [vmem:[%s307 + $0x1c] sm:$0xf]
        %v316 = vld [vmem:[%s307 + $0x20] sm:$0xf]
        %v317 = vld [vmem:[%s307 + $0x24] sm:$0xf]
        %v318 = vld [vmem:[%s307 + $0x28] sm:$0xf]
        %v319 = vld [vmem:[%s307 + $0x2c] sm:$0xf]
        %v320 = vld [vmem:[%s307 + $0x30] sm:$0xf]
        %v321 = vld [vmem:[%s307 + $0x34] sm:$0xf]
        %v322 = vld [vmem:[%s307 + $0x38] sm:$0xf]
        %v323 = vld [vmem:[%s307 + $0x3c] sm:$0xf]
        %v324 = vunpack.c.l.bf16 %v308
        %v325 = vunpack.c.l.bf16 %v309
        %v326 = vunpack.c.l.bf16 %v310
        %v327 = vunpack.c.l.bf16 %v311
        %v328 = vunpack.c.l.bf16 %v312
        %v329 = vunpack.c.l.bf16 %v313
        %v330 = vunpack.c.l.bf16 %v314
        %v331 = vunpack.c.l.bf16 %v315
        %v332 = vunpack.c.l.bf16 %v316
        %v333 = vunpack.c.l.bf16 %v317
        %v334 = vunpack.c.l.bf16 %v318
        %v335 = vunpack.c.l.bf16 %v319
        %v336 = vunpack.c.l.bf16 %v320
        %v337 = vunpack.c.l.bf16 %v321
        %v338 = vunpack.c.l.bf16 %v322
        %v339 = vunpack.c.l.bf16 %v323
        %v340 = vstv %s306
        %v341 = vmul.f32 %v340, %v324
        %v342 = vmul.f32 %v340, %v325
        %v343 = vmul.f32 %v340, %v326
        %v344 = vmul.f32 %v340, %v327
        %v345 = vmul.f32 %v340, %v328
        %v346 = vmul.f32 %v340, %v329
        %v347 = vmul.f32 %v340, %v330
        %v348 = vmul.f32 %v340, %v331
        %v349 = vmul.f32 %v340, %v332
        %v350 = vmul.f32 %v340, %v333
        %v351 = vmul.f32 %v340, %v334
        %v352 = vmul.f32 %v340, %v335
        %v353 = vmul.f32 %v340, %v336
        %v354 = vmul.f32 %v340, %v337
        %v355 = vmul.f32 %v340, %v338
        %v356 = vmul.f32 %v340, %v339
        %v357 = vadd.f32 %v257, %v341
        %v358 = vadd.f32 %v258, %v342
        %v359 = vadd.f32 %v259, %v343
        %v360 = vadd.f32 %v260, %v344
        %v361 = vadd.f32 %v261, %v345
        %v362 = vadd.f32 %v262, %v346
        %v363 = vadd.f32 %v263, %v347
        %v364 = vadd.f32 %v264, %v348
        %v365 = vadd.f32 %v265, %v349
        %v366 = vadd.f32 %v266, %v350
        %v367 = vadd.f32 %v267, %v351
        %v368 = vadd.f32 %v268, %v352
        %v369 = vadd.f32 %v269, %v353
        %v370 = vadd.f32 %v270, %v354
        %v371 = vadd.f32 %v271, %v355
        %v372 = vadd.f32 %v272, %v356
        %s373 = scalar_lea.vmem %s3, 128
        %v374 = vld [vmem:[%s373] sm:$0xff]
        %v375 = vld [vmem:[%s373 + $0x8] sm:$0xff]
        %v376 = vld [vmem:[%s373 + $0x10] sm:$0xff]
        %v377 = vld [vmem:[%s373 + $0x18] sm:$0xff]
        %v378 = vld [vmem:[%s373 + $0x20] sm:$0xff]
        %v379 = vld [vmem:[%s373 + $0x28] sm:$0xff]
        %v380 = vld [vmem:[%s373 + $0x30] sm:$0xff]
        %v381 = vld [vmem:[%s373 + $0x38] sm:$0xff]
        %v382 = vld [vmem:[%s373 + $0x40] sm:$0xff]
        %v383 = vld [vmem:[%s373 + $0x48] sm:$0xff]
        %v384 = vld [vmem:[%s373 + $0x50] sm:$0xff]
        %v385 = vld [vmem:[%s373 + $0x58] sm:$0xff]
        %v386 = vld [vmem:[%s373 + $0x60] sm:$0xff]
        %v387 = vld [vmem:[%s373 + $0x68] sm:$0xff]
        %v388 = vld [vmem:[%s373 + $0x70] sm:$0xff]
        %v389 = vld [vmem:[%s373 + $0x78] sm:$0xff]
        %v390 = vmul.f32 %v340, %v374
        %v391 = vmul.f32 %v340, %v375
        %v392 = vmul.f32 %v340, %v376
        %v393 = vmul.f32 %v340, %v377
        %v394 = vmul.f32 %v340, %v378
        %v395 = vmul.f32 %v340, %v379
        %v396 = vmul.f32 %v340, %v380
        %v397 = vmul.f32 %v340, %v381
        %v398 = vmul.f32 %v340, %v382
        %v399 = vmul.f32 %v340, %v383
        %v400 = vmul.f32 %v340, %v384
        %v401 = vmul.f32 %v340, %v385
        %v402 = vmul.f32 %v340, %v386
        %v403 = vmul.f32 %v340, %v387
        %v404 = vmul.f32 %v340, %v388
        %v405 = vmul.f32 %v340, %v389
        %v406 = vadd.f32 %v289, %v390
        %v407 = vadd.f32 %v290, %v391
        %v408 = vadd.f32 %v291, %v392
        %v409 = vadd.f32 %v292, %v393
        %v410 = vadd.f32 %v293, %v394
        %v411 = vadd.f32 %v294, %v395
        %v412 = vadd.f32 %v295, %v396
        %v413 = vadd.f32 %v296, %v397
        %v414 = vadd.f32 %v297, %v398
        %v415 = vadd.f32 %v298, %v399
        %v416 = vadd.f32 %v299, %v400
        %v417 = vadd.f32 %v300, %v401
        %v418 = vadd.f32 %v301, %v402
        %v419 = vadd.f32 %v302, %v403
        %v420 = vadd.f32 %v303, %v404
        %v421 = vadd.f32 %v304, %v405
        %s422 = sadd.s32 %s222, 2
        %s423 = sld [smem:[#allocation5 + %s422]]
        %s424 = scalar_lea.vmem %s2, 128
        %v425 = vld [vmem:[%s424] sm:$0xf]
        %v426 = vld [vmem:[%s424 + $0x4] sm:$0xf]
        %v427 = vld [vmem:[%s424 + $0x8] sm:$0xf]
        %v428 = vld [vmem:[%s424 + $0xc] sm:$0xf]
        %v429 = vld [vmem:[%s424 + $0x10] sm:$0xf]
        %v430 = vld [vmem:[%s424 + $0x14] sm:$0xf]
        %v431 = vld [vmem:[%s424 + $0x18] sm:$0xf]
        %v432 = vld [vmem:[%s424 + $0x1c] sm:$0xf]
        %v433 = vld [vmem:[%s424 + $0x20] sm:$0xf]
        %v434 = vld [vmem:[%s424 + $0x24] sm:$0xf]
        %v435 = vld [vmem:[%s424 + $0x28] sm:$0xf]
        %v436 = vld [vmem:[%s424 + $0x2c] sm:$0xf]
        %v437 = vld [vmem:[%s424 + $0x30] sm:$0xf]
        %v438 = vld [vmem:[%s424 + $0x34] sm:$0xf]
        %v439 = vld [vmem:[%s424 + $0x38] sm:$0xf]
        %v440 = vld [vmem:[%s424 + $0x3c] sm:$0xf]
        %v441 = vunpack.c.l.bf16 %v425
        %v442 = vunpack.c.l.bf16 %v426
        %v443 = vunpack.c.l.bf16 %v427
        %v444 = vunpack.c.l.bf16 %v428
        %v445 = vunpack.c.l.bf16 %v429
        %v446 = vunpack.c.l.bf16 %v430
        %v447 = vunpack.c.l.bf16 %v431
        %v448 = vunpack.c.l.bf16 %v432
        %v449 = vunpack.c.l.bf16 %v433
        %v450 = vunpack.c.l.bf16 %v434
        %v451 = vunpack.c.l.bf16 %v435
        %v452 = vunpack.c.l.bf16 %v436
        %v453 = vunpack.c.l.bf16 %v437
        %v454 = vunpack.c.l.bf16 %v438
        %v455 = vunpack.c.l.bf16 %v439
        %v456 = vunpack.c.l.bf16 %v440
        %v457 = vstv %s423
        %v458 = vmul.f32 %v457, %v441
        %v459 = vmul.f32 %v457, %v442
        %v460 = vmul.f32 %v457, %v443
        %v461 = vmul.f32 %v457, %v444
        %v462 = vmul.f32 %v457, %v445
        %v463 = vmul.f32 %v457, %v446
        %v464 = vmul.f32 %v457, %v447
        %v465 = vmul.f32 %v457, %v448
        %v466 = vmul.f32 %v457, %v449
        %v467 = vmul.f32 %v457, %v450
        %v468 = vmul.f32 %v457, %v451
        %v469 = vmul.f32 %v457, %v452
        %v470 = vmul.f32 %v457, %v453
        %v471 = vmul.f32 %v457, %v454
        %v472 = vmul.f32 %v457, %v455
        %v473 = vmul.f32 %v457, %v456
        %v474 = vadd.f32 %v357, %v458
        %v475 = vadd.f32 %v358, %v459
        %v476 = vadd.f32 %v359, %v460
        %v477 = vadd.f32 %v360, %v461
        %v478 = vadd.f32 %v361, %v462
        %v479 = vadd.f32 %v362, %v463
        %v480 = vadd.f32 %v363, %v464
        %v481 = vadd.f32 %v364, %v465
        %v482 = vadd.f32 %v365, %v466
        %v483 = vadd.f32 %v366, %v467
        %v484 = vadd.f32 %v367, %v468
        %v485 = vadd.f32 %v368, %v469
        %v486 = vadd.f32 %v369, %v470
        %v487 = vadd.f32 %v370, %v471
        %v488 = vadd.f32 %v371, %v472
        %v489 = vadd.f32 %v372, %v473
        %s490 = scalar_lea.vmem %s3, 256
        %v491 = vld [vmem:[%s490] sm:$0xff]
        %v492 = vld [vmem:[%s490 + $0x8] sm:$0xff]
        %v493 = vld [vmem:[%s490 + $0x10] sm:$0xff]
        %v494 = vld [vmem:[%s490 + $0x18] sm:$0xff]
        %v495 = vld [vmem:[%s490 + $0x20] sm:$0xff]
        %v496 = vld [vmem:[%s490 + $0x28] sm:$0xff]
        %v497 = vld [vmem:[%s490 + $0x30] sm:$0xff]
        %v498 = vld [vmem:[%s490 + $0x38] sm:$0xff]
        %v499 = vld [vmem:[%s490 + $0x40] sm:$0xff]
        %v500 = vld [vmem:[%s490 + $0x48] sm:$0xff]
        %v501 = vld [vmem:[%s490 + $0x50] sm:$0xff]
        %v502 = vld [vmem:[%s490 + $0x58] sm:$0xff]
        %v503 = vld [vmem:[%s490 + $0x60] sm:$0xff]
        %v504 = vld [vmem:[%s490 + $0x68] sm:$0xff]
        %v505 = vld [vmem:[%s490 + $0x70] sm:$0xff]
        %v506 = vld [vmem:[%s490 + $0x78] sm:$0xff]
        %v507 = vmul.f32 %v457, %v491
        %v508 = vmul.f32 %v457, %v492
        %v509 = vmul.f32 %v457, %v493
        %v510 = vmul.f32 %v457, %v494
        %v511 = vmul.f32 %v457, %v495
        %v512 = vmul.f32 %v457, %v496
        %v513 = vmul.f32 %v457, %v497
        %v514 = vmul.f32 %v457, %v498
        %v515 = vmul.f32 %v457, %v499
        %v516 = vmul.f32 %v457, %v500
        %v517 = vmul.f32 %v457, %v501
        %v518 = vmul.f32 %v457, %v502
        %v519 = vmul.f32 %v457, %v503
        %v520 = vmul.f32 %v457, %v504
        %v521 = vmul.f32 %v457, %v505
        %v522 = vmul.f32 %v457, %v506
        %v523 = vadd.f32 %v406, %v507
        %v524 = vadd.f32 %v407, %v508
        %v525 = vadd.f32 %v408, %v509
        %v526 = vadd.f32 %v409, %v510
        %v527 = vadd.f32 %v410, %v511
        %v528 = vadd.f32 %v411, %v512
        %v529 = vadd.f32 %v412, %v513
        %v530 = vadd.f32 %v413, %v514
        %v531 = vadd.f32 %v414, %v515
        %v532 = vadd.f32 %v415, %v516
        %v533 = vadd.f32 %v416, %v517
        %v534 = vadd.f32 %v417, %v518
        %v535 = vadd.f32 %v418, %v519
        %v536 = vadd.f32 %v419, %v520
        %v537 = vadd.f32 %v420, %v521
        %v538 = vadd.f32 %v421, %v522
        %s539 = sadd.s32 %s222, 3
        %s540 = sld [smem:[#allocation5 + %s539]]
        %s541 = scalar_lea.vmem %s2, 192
        %v542 = vld [vmem:[%s541] sm:$0xf]
        %v543 = vld [vmem:[%s541 + $0x4] sm:$0xf]
        %v544 = vld [vmem:[%s541 + $0x8] sm:$0xf]
        %v545 = vld [vmem:[%s541 + $0xc] sm:$0xf]
        %v546 = vld [vmem:[%s541 + $0x10] sm:$0xf]
        %v547 = vld [vmem:[%s541 + $0x14] sm:$0xf]
        %v548 = vld [vmem:[%s541 + $0x18] sm:$0xf]
        %v549 = vld [vmem:[%s541 + $0x1c] sm:$0xf]
        %v550 = vld [vmem:[%s541 + $0x20] sm:$0xf]
        %v551 = vld [vmem:[%s541 + $0x24] sm:$0xf]
        %v552 = vld [vmem:[%s541 + $0x28] sm:$0xf]
        %v553 = vld [vmem:[%s541 + $0x2c] sm:$0xf]
        %v554 = vld [vmem:[%s541 + $0x30] sm:$0xf]
        %v555 = vld [vmem:[%s541 + $0x34] sm:$0xf]
        %v556 = vld [vmem:[%s541 + $0x38] sm:$0xf]
        %v557 = vld [vmem:[%s541 + $0x3c] sm:$0xf]
        %v558 = vunpack.c.l.bf16 %v542
        %v559 = vunpack.c.l.bf16 %v543
        %v560 = vunpack.c.l.bf16 %v544
        %v561 = vunpack.c.l.bf16 %v545
        %v562 = vunpack.c.l.bf16 %v546
        %v563 = vunpack.c.l.bf16 %v547
        %v564 = vunpack.c.l.bf16 %v548
        %v565 = vunpack.c.l.bf16 %v549
        %v566 = vunpack.c.l.bf16 %v550
        %v567 = vunpack.c.l.bf16 %v551
        %v568 = vunpack.c.l.bf16 %v552
        %v569 = vunpack.c.l.bf16 %v553
        %v570 = vunpack.c.l.bf16 %v554
        %v571 = vunpack.c.l.bf16 %v555
        %v572 = vunpack.c.l.bf16 %v556
        %v573 = vunpack.c.l.bf16 %v557
        %v574 = vstv %s540
        %v575 = vmul.f32 %v574, %v558
        %v576 = vmul.f32 %v574, %v559
        %v577 = vmul.f32 %v574, %v560
        %v578 = vmul.f32 %v574, %v561
        %v579 = vmul.f32 %v574, %v562
        %v580 = vmul.f32 %v574, %v563
        %v581 = vmul.f32 %v574, %v564
        %v582 = vmul.f32 %v574, %v565
        %v583 = vmul.f32 %v574, %v566
        %v584 = vmul.f32 %v574, %v567
        %v585 = vmul.f32 %v574, %v568
        %v586 = vmul.f32 %v574, %v569
        %v587 = vmul.f32 %v574, %v570
        %v588 = vmul.f32 %v574, %v571
        %v589 = vmul.f32 %v574, %v572
        %v590 = vmul.f32 %v574, %v573
        %v591 = vadd.f32 %v474, %v575
        %v592 = vadd.f32 %v475, %v576
        %v593 = vadd.f32 %v476, %v577
        %v594 = vadd.f32 %v477, %v578
        %v595 = vadd.f32 %v478, %v579
        %v596 = vadd.f32 %v479, %v580
        %v597 = vadd.f32 %v480, %v581
        %v598 = vadd.f32 %v481, %v582
        %v599 = vadd.f32 %v482, %v583
        %v600 = vadd.f32 %v483, %v584
        %v601 = vadd.f32 %v484, %v585
        %v602 = vadd.f32 %v485, %v586
        %v603 = vadd.f32 %v486, %v587
        %v604 = vadd.f32 %v487, %v588
        %v605 = vadd.f32 %v488, %v589
        %v606 = vadd.f32 %v489, %v590
        %s607 = scalar_lea.vmem %s3, 384
        %v608 = vld [vmem:[%s607] sm:$0xff]
        %v609 = vld [vmem:[%s607 + $0x8] sm:$0xff]
        %v610 = vld [vmem:[%s607 + $0x10] sm:$0xff]
        %v611 = vld [vmem:[%s607 + $0x18] sm:$0xff]
        %v612 = vld [vmem:[%s607 + $0x20] sm:$0xff]
        %v613 = vld [vmem:[%s607 + $0x28] sm:$0xff]
        %v614 = vld [vmem:[%s607 + $0x30] sm:$0xff]
        %v615 = vld [vmem:[%s607 + $0x38] sm:$0xff]
        %v616 = vld [vmem:[%s607 + $0x40] sm:$0xff]
        %v617 = vld [vmem:[%s607 + $0x48] sm:$0xff]
        %v618 = vld [vmem:[%s607 + $0x50] sm:$0xff]
        %v619 = vld [vmem:[%s607 + $0x58] sm:$0xff]
        %v620 = vld [vmem:[%s607 + $0x60] sm:$0xff]
        %v621 = vld [vmem:[%s607 + $0x68] sm:$0xff]
        %v622 = vld [vmem:[%s607 + $0x70] sm:$0xff]
        %v623 = vld [vmem:[%s607 + $0x78] sm:$0xff]
        %v624 = vmul.f32 %v574, %v608
        %v625 = vmul.f32 %v574, %v609
        %v626 = vmul.f32 %v574, %v610
        %v627 = vmul.f32 %v574, %v611
        %v628 = vmul.f32 %v574, %v612
        %v629 = vmul.f32 %v574, %v613
        %v630 = vmul.f32 %v574, %v614
        %v631 = vmul.f32 %v574, %v615
        %v632 = vmul.f32 %v574, %v616
        %v633 = vmul.f32 %v574, %v617
        %v634 = vmul.f32 %v574, %v618
        %v635 = vmul.f32 %v574, %v619
        %v636 = vmul.f32 %v574, %v620
        %v637 = vmul.f32 %v574, %v621
        %v638 = vmul.f32 %v574, %v622
        %v639 = vmul.f32 %v574, %v623
        %v640 = vadd.f32 %v523, %v624
        %v641 = vadd.f32 %v524, %v625
        %v642 = vadd.f32 %v525, %v626
        %v643 = vadd.f32 %v526, %v627
        %v644 = vadd.f32 %v527, %v628
        %v645 = vadd.f32 %v528, %v629
        %v646 = vadd.f32 %v529, %v630
        %v647 = vadd.f32 %v530, %v631
        %v648 = vadd.f32 %v531, %v632
        %v649 = vadd.f32 %v532, %v633
        %v650 = vadd.f32 %v533, %v634
        %v651 = vadd.f32 %v534, %v635
        %v652 = vadd.f32 %v535, %v636
        %v653 = vadd.f32 %v536, %v637
        %v654 = vadd.f32 %v537, %v638
        %v655 = vadd.f32 %v538, %v639
        %v656 = vpack.c.bf16 %v592, %v591
        %v657 = vpack.c.bf16 %v594, %v593
        %v658 = vpack.c.bf16 %v596, %v595
        %v659 = vpack.c.bf16 %v598, %v597
        %v660 = vpack.c.bf16 %v600, %v599
        %v661 = vpack.c.bf16 %v602, %v601
        %v662 = vpack.c.bf16 %v604, %v603
        %v663 = vpack.c.bf16 %v606, %v605
        %664 = vst [vmem:[#allocation2] sm:$0xff] %v656
        %665 = vst [vmem:[#allocation2 + $0x8] sm:$0xff] %v657
        %666 = vst [vmem:[#allocation2 + $0x10] sm:$0xff] %v658
        %667 = vst [vmem:[#allocation2 + $0x18] sm:$0xff] %v659
        %668 = vst [vmem:[#allocation2 + $0x20] sm:$0xff] %v660
        %669 = vst [vmem:[#allocation2 + $0x28] sm:$0xff] %v661
        %670 = vst [vmem:[#allocation2 + $0x30] sm:$0xff] %v662
        %671 = vst [vmem:[#allocation2 + $0x38] sm:$0xff] %v663
        %vm672 = vcmask 7168
        %673 = vst.msk [vmem:[#allocation3] sm:$0xff] %vm672, %v640
        %674 = vst.msk [vmem:[#allocation3 + $0x8] sm:$0xff] %vm672, %v641
        %675 = vst.msk [vmem:[#allocation3 + $0x10] sm:$0xff] %vm672, %v642
        %676 = vst.msk [vmem:[#allocation3 + $0x18] sm:$0xff] %vm672, %v643
        %677 = vst.msk [vmem:[#allocation3 + $0x20] sm:$0xff] %vm672, %v644
        %678 = vst.msk [vmem:[#allocation3 + $0x28] sm:$0xff] %vm672, %v645
        %679 = vst.msk [vmem:[#allocation3 + $0x30] sm:$0xff] %vm672, %v646
        %680 = vst.msk [vmem:[#allocation3 + $0x38] sm:$0xff] %vm672, %v647
        %681 = vst.msk [vmem:[#allocation3 + $0x40] sm:$0xff] %vm672, %v648
        %682 = vst.msk [vmem:[#allocation3 + $0x48] sm:$0xff] %vm672, %v649
        %683 = vst.msk [vmem:[#allocation3 + $0x50] sm:$0xff] %vm672, %v650
        %684 = vst.msk [vmem:[#allocation3 + $0x58] sm:$0xff] %vm672, %v651
        %685 = vst.msk [vmem:[#allocation3 + $0x60] sm:$0xff] %vm672, %v652
        %686 = vst.msk [vmem:[#allocation3 + $0x68] sm:$0xff] %vm672, %v653
        %687 = vst.msk [vmem:[#allocation3 + $0x70] sm:$0xff] %vm672, %v654
        %688 = vst.msk [vmem:[#allocation3 + $0x78] sm:$0xff] %vm672, %v655
      $region36: #{cond_conv_forward.1} parent=31 // pred_fallthru
        _
      %v689 = vld [vmem:[#allocation2] sm:$0xff]
      %v690 = vld [vmem:[#allocation2 + $0x8] sm:$0xff]
      %v691 = vld [vmem:[#allocation2 + $0x10] sm:$0xff]
      %v692 = vld [vmem:[#allocation2 + $0x18] sm:$0xff]
      %v693 = vld [vmem:[#allocation2 + $0x20] sm:$0xff]
      %v694 = vld [vmem:[#allocation2 + $0x28] sm:$0xff]
      %v695 = vld [vmem:[#allocation2 + $0x30] sm:$0xff]
      %v696 = vld [vmem:[#allocation2 + $0x38] sm:$0xff]
      %v697 = vld [vmem:[%s205] sm:$0xff]
      %v698 = vld [vmem:[%s205 + $0x8] sm:$0xff]
      %v699 = vld [vmem:[%s205 + $0x10] sm:$0xff]
      %v700 = vld [vmem:[%s205 + $0x18] sm:$0xff]
      %v701 = vld [vmem:[%s205 + $0x20] sm:$0xff]
      %v702 = vld [vmem:[%s205 + $0x28] sm:$0xff]
      %v703 = vld [vmem:[%s205 + $0x30] sm:$0xff]
      %v704 = vld [vmem:[%s205 + $0x38] sm:$0xff]
      %v705 = vld [vmem:[%s205 + $0x40] sm:$0xff]
      %v706 = vld [vmem:[%s205 + $0x48] sm:$0xff]
      %v707 = vld [vmem:[%s205 + $0x50] sm:$0xff]
      %v708 = vld [vmem:[%s205 + $0x58] sm:$0xff]
      %v709 = vld [vmem:[%s205 + $0x60] sm:$0xff]
      %v710 = vld [vmem:[%s205 + $0x68] sm:$0xff]
      %v711 = vld [vmem:[%s205 + $0x70] sm:$0xff]
      %v712 = vld [vmem:[%s205 + $0x78] sm:$0xff]
      %v713 = vld [vmem:[#allocation3] sm:$0xff]
      %v714 = vld [vmem:[#allocation3 + $0x8] sm:$0xff]
      %v715 = vld [vmem:[#allocation3 + $0x10] sm:$0xff]
      %v716 = vld [vmem:[#allocation3 + $0x18] sm:$0xff]
      %v717 = vld [vmem:[#allocation3 + $0x20] sm:$0xff]
      %v718 = vld [vmem:[#allocation3 + $0x28] sm:$0xff]
      %v719 = vld [vmem:[#allocation3 + $0x30] sm:$0xff]
      %v720 = vld [vmem:[#allocation3 + $0x38] sm:$0xff]
      %v721 = vld [vmem:[#allocation3 + $0x40] sm:$0xff]
      %v722 = vld [vmem:[#allocation3 + $0x48] sm:$0xff]
      %v723 = vld [vmem:[#allocation3 + $0x50] sm:$0xff]
      %v724 = vld [vmem:[#allocation3 + $0x58] sm:$0xff]
      %v725 = vld [vmem:[#allocation3 + $0x60] sm:$0xff]
      %v726 = vld [vmem:[#allocation3 + $0x68] sm:$0xff]
      %v727 = vld [vmem:[#allocation3 + $0x70] sm:$0xff]
      %v728 = vld [vmem:[#allocation3 + $0x78] sm:$0xff]
      %730 = vset.pattern.permute.xlu0 0
      %731 = vperm.xlu0 %730, %v713
      %v732 = vpop.permute.xlu0 %731
      %735 = vset.pattern.permute.xlu0 0
      %736 = vperm.xlu0 %735, %v714
      %v737 = vpop.permute.xlu0 %736
      %740 = vset.pattern.permute.xlu0 0
      %741 = vperm.xlu0 %740, %v715
      %v742 = vpop.permute.xlu0 %741
      %745 = vset.pattern.permute.xlu0 0
      %746 = vperm.xlu0 %745, %v716
      %v747 = vpop.permute.xlu0 %746
      %750 = vset.pattern.permute.xlu0 0
      %751 = vperm.xlu0 %750, %v717
      %v752 = vpop.permute.xlu0 %751
      %755 = vset.pattern.permute.xlu0 0
      %756 = vperm.xlu0 %755, %v718
      %v757 = vpop.permute.xlu0 %756
      %760 = vset.pattern.permute.xlu0 0
      %761 = vperm.xlu0 %760, %v719
      %v762 = vpop.permute.xlu0 %761
      %765 = vset.pattern.permute.xlu0 0
      %766 = vperm.xlu0 %765, %v720
      %v767 = vpop.permute.xlu0 %766
      %770 = vset.pattern.permute.xlu0 0
      %771 = vperm.xlu0 %770, %v721
      %v772 = vpop.permute.xlu0 %771
      %775 = vset.pattern.permute.xlu0 0
      %776 = vperm.xlu0 %775, %v722
      %v777 = vpop.permute.xlu0 %776
      %780 = vset.pattern.permute.xlu0 0
      %781 = vperm.xlu0 %780, %v723
      %v782 = vpop.permute.xlu0 %781
      %785 = vset.pattern.permute.xlu0 0
      %786 = vperm.xlu0 %785, %v724
      %v787 = vpop.permute.xlu0 %786
      %790 = vset.pattern.permute.xlu0 0
      %791 = vperm.xlu0 %790, %v725
      %v792 = vpop.permute.xlu0 %791
      %795 = vset.pattern.permute.xlu0 0
      %796 = vperm.xlu0 %795, %v726
      %v797 = vpop.permute.xlu0 %796
      %800 = vset.pattern.permute.xlu0 0
      %801 = vperm.xlu0 %800, %v727
      %v802 = vpop.permute.xlu0 %801
      %805 = vset.pattern.permute.xlu0 0
      %806 = vperm.xlu0 %805, %v728
      %v807 = vpop.permute.xlu0 %806
      %v825 = vunpack.c.l.b16 %v697
      %v826 = vunpack.c.h.b16 %v697
      %v827 = vunpack.c.l.b16 %v698
      %v828 = vunpack.c.h.b16 %v698
      %v829 = vunpack.c.l.b16 %v699
      %v830 = vunpack.c.h.b16 %v699
      %v831 = vunpack.c.l.b16 %v700
      %v832 = vunpack.c.h.b16 %v700
      %v833 = vunpack.c.l.b16 %v701
      %v834 = vunpack.c.h.b16 %v701
      %v835 = vunpack.c.l.b16 %v702
      %v836 = vunpack.c.h.b16 %v702
      %v837 = vunpack.c.l.b16 %v703
      %v838 = vunpack.c.h.b16 %v703
      %v839 = vunpack.c.l.b16 %v704
      %v840 = vunpack.c.h.b16 %v704
      %v841 = vunpack.c.l.b16 %v705
      %v842 = vunpack.c.h.b16 %v705
      %v843 = vunpack.c.l.b16 %v706
      %v844 = vunpack.c.h.b16 %v706
      %v845 = vunpack.c.l.b16 %v707
      %v846 = vunpack.c.h.b16 %v707
      %v847 = vunpack.c.l.b16 %v708
      %v848 = vunpack.c.h.b16 %v708
      %v849 = vunpack.c.l.b16 %v709
      %v850 = vunpack.c.h.b16 %v709
      %v851 = vunpack.c.l.b16 %v710
      %v852 = vunpack.c.h.b16 %v710
      %v853 = vunpack.c.l.b16 %v711
      %v854 = vunpack.c.h.b16 %v711
      %v855 = vunpack.c.l.b16 %v712
      %v856 = vunpack.c.h.b16 %v712
      %v857 = vpack.c.b16 %v827, %v825
      %v858 = vpack.c.b16 %v828, %v826
      %v859 = vpack.c.b16 %v831, %v829
      %v860 = vpack.c.b16 %v832, %v830
      %v861 = vpack.c.b16 %v835, %v833
      %v862 = vpack.c.b16 %v836, %v834
      %v863 = vpack.c.b16 %v839, %v837
      %v864 = vpack.c.b16 %v840, %v838
      %v865 = vpack.c.b16 %v843, %v841
      %v866 = vpack.c.b16 %v844, %v842
      %v867 = vpack.c.b16 %v847, %v845
      %v868 = vpack.c.b16 %v848, %v846
      %v869 = vpack.c.b16 %v851, %v849
      %v870 = vpack.c.b16 %v852, %v850
      %v871 = vpack.c.b16 %v855, %v853
      %v872 = vpack.c.b16 %v856, %v854
      %889 = vmatprep.subr.bf16.mxu0 %v858
      %890 = vmatpush1.bf16.msra.mxu0 %v857
      %891 = vmatprep.subr.bf16.mxu0 %v860
      %892 = vmatpush1.bf16.msra.mxu0 %v859
      %893 = vmatprep.subr.bf16.mxu0 %v862
      %894 = vmatpush1.bf16.msra.mxu0 %v861
      %895 = vmatprep.subr.bf16.mxu0 %v864
      %896 = vmatpush1.bf16.msra.mxu0 %v863
      %897 = vmatprep.subr.bf16.mxu0 %v866
      %898 = vmatpush1.bf16.msra.mxu0 %v865
      %899 = vmatprep.subr.bf16.mxu0 %v868
      %900 = vmatpush1.bf16.msra.mxu0 %v867
      %901 = vmatprep.subr.bf16.mxu0 %v870
      %902 = vmatpush1.bf16.msra.mxu0 %v869
      %903 = vmatprep.subr.bf16.mxu0 %v872
      %904 = vmatpush1.bf16.msra.mxu0 %v871
      %905 = vmatprep.subr.bf16.mxu0 0
      %906 = vmatpush1.bf16.msra.mxu0 0
      %907 = vmatprep.subr.bf16.mxu0 0
      %908 = vmatpush1.bf16.msra.mxu0 0
      %909 = vmatprep.subr.bf16.mxu0 0
      %910 = vmatpush1.bf16.msra.mxu0 0
      %911 = vmatprep.subr.bf16.mxu0 0
      %912 = vmatpush1.bf16.msra.mxu0 0
      %913 = vmatprep.subr.bf16.mxu0 0
      %914 = vmatpush1.bf16.msra.mxu0 0
      %915 = vmatprep.subr.bf16.mxu0 0
      %916 = vmatpush1.bf16.msra.mxu0 0
      %917 = vmatprep.subr.bf16.mxu0 0
      %918 = vmatpush1.bf16.msra.mxu0 0
      %919 = vmatprep.subr.bf16.mxu0 0
      %920 = vmatpush1.bf16.msra.mxu0 0
      %921 = vmatprep.mubr.bf16.mxu0 0
      %922 = vmatmul.mubr.bf16.gmra.mrb[0].mxu0 %v689
      %v923 = vpop.f32.mrb[0].mxu0
      %v924 = vadd.f32 %v732, %v923
      %v925 = vpop.f32.mrb[0].mxu0
      %v926 = vadd.f32 %v732, %v925
      %v927 = vpop.f32.mrb[0].mxu0
      %v928 = vadd.f32 %v737, %v927
      %v929 = vpop.f32.mrb[0].mxu0
      %v930 = vadd.f32 %v737, %v929
      %931 = vmatprep.mubr.bf16.mxu0 0
      %932 = vmatmul.mubr.bf16.gmra.mrb[0].mxu0 %v690
      %v933 = vpop.f32.mrb[0].mxu0
      %v934 = vadd.f32 %v742, %v933
      %v935 = vpop.f32.mrb[0].mxu0
      %v936 = vadd.f32 %v742, %v935
      %v937 = vpop.f32.mrb[0].mxu0
      %v938 = vadd.f32 %v747, %v937
      %v939 = vpop.f32.mrb[0].mxu0
      %v940 = vadd.f32 %v747, %v939
      %941 = vmatprep.mubr.bf16.mxu0 0
      %942 = vmatmul.mubr.bf16.gmra.mrb[0].mxu0 %v691
      %v943 = vpop.f32.mrb[0].mxu0
      %v944 = vadd.f32 %v752, %v943
      %v945 = vpop.f32.mrb[0].mxu0
      %v946 = vadd.f32 %v752, %v945
      %v947 = vpop.f32.mrb[0].mxu0
      %v948 = vadd.f32 %v757, %v947
      %v949 = vpop.f32.mrb[0].mxu0
      %v950 = vadd.f32 %v757, %v949
      %951 = vmatprep.mubr.bf16.mxu0 0
      %952 = vmatmul.mubr.bf16.gmra.mrb[0].mxu0 %v692
      %v953 = vpop.f32.mrb[0].mxu0
      %v954 = vadd.f32 %v762, %v953
      %v955 = vpop.f32.mrb[0].mxu0
      %v956 = vadd.f32 %v762, %v955
      %v957 = vpop.f32.mrb[0].mxu0
      %v958 = vadd.f32 %v767, %v957
      %v959 = vpop.f32.mrb[0].mxu0
      %v960 = vadd.f32 %v767, %v959
      %961 = vmatprep.mubr.bf16.mxu0 0
      %962 = vmatmul.mubr.bf16.gmra.mrb[0].mxu0 %v693
      %v963 = vpop.f32.mrb[0].mxu0
      %v964 = vadd.f32 %v772, %v963
      %v965 = vpop.f32.mrb[0].mxu0
      %v966 = vadd.f32 %v772, %v965
      %v967 = vpop.f32.mrb[0].mxu0
      %v968 = vadd.f32 %v777, %v967
      %v969 = vpop.f32.mrb[0].mxu0
      %v970 = vadd.f32 %v777, %v969
      %971 = vmatprep.mubr.bf16.mxu0 0
      %972 = vmatmul.mubr.bf16.gmra.mrb[0].mxu0 %v694
      %v973 = vpop.f32.mrb[0].mxu0
      %v974 = vadd.f32 %v782, %v973
      %v975 = vpop.f32.mrb[0].mxu0
      %v976 = vadd.f32 %v782, %v975
      %v977 = vpop.f32.mrb[0].mxu0
      %v978 = vadd.f32 %v787, %v977
      %v979 = vpop.f32.mrb[0].mxu0
      %v980 = vadd.f32 %v787, %v979
      %981 = vmatprep.mubr.bf16.mxu0 0
      %982 = vmatmul.mubr.bf16.gmra.mrb[0].mxu0 %v695
      %v983 = vpop.f32.mrb[0].mxu0
      %v984 = vadd.f32 %v792, %v983
      %v985 = vpop.f32.mrb[0].mxu0
      %v986 = vadd.f32 %v792, %v985
      %v987 = vpop.f32.mrb[0].mxu0
      %v988 = vadd.f32 %v797, %v987
      %v989 = vpop.f32.mrb[0].mxu0
      %v990 = vadd.f32 %v797, %v989
      %991 = vmatprep.mubr.bf16.mxu0 0
      %992 = vmatmul.mubr.bf16.gmra.mrb[0].mxu0 %v696
      %v993 = vpop.f32.mrb[0].mxu0
      %v994 = vadd.f32 %v802, %v993
      %v995 = vpop.f32.mrb[0].mxu0
      %v996 = vadd.f32 %v802, %v995
      %v997 = vpop.f32.mrb[0].mxu0
      %v998 = vadd.f32 %v807, %v997
      %v999 = vpop.f32.mrb[0].mxu0
      %v1000 = vadd.f32 %v807, %v999
      %1001 = vdwg.mxu0
      %1002 = vst [vmem:[%s215] sm:$0xff] %v924
      %1003 = vst [vmem:[%s215 + $0x8] sm:$0xff] %v926
      %1004 = vst [vmem:[%s215 + $0x10] sm:$0xff] %v928
      %1005 = vst [vmem:[%s215 + $0x18] sm:$0xff] %v930
      %1006 = vst [vmem:[%s215 + $0x20] sm:$0xff] %v934
      %1007 = vst [vmem:[%s215 + $0x28] sm:$0xff] %v936
      %1008 = vst [vmem:[%s215 + $0x30] sm:$0xff] %v938
      %1009 = vst [vmem:[%s215 + $0x38] sm:$0xff] %v940
      %1010 = vst [vmem:[%s215 + $0x40] sm:$0xff] %v944
      %1011 = vst [vmem:[%s215 + $0x48] sm:$0xff] %v946
      %1012 = vst [vmem:[%s215 + $0x50] sm:$0xff] %v948
      %1013 = vst [vmem:[%s215 + $0x58] sm:$0xff] %v950
      %1014 = vst [vmem:[%s215 + $0x60] sm:$0xff] %v954
      %1015 = vst [vmem:[%s215 + $0x68] sm:$0xff] %v956
      %1016 = vst [vmem:[%s215 + $0x70] sm:$0xff] %v958
      %1017 = vst [vmem:[%s215 + $0x78] sm:$0xff] %v960
      %1018 = vst [vmem:[%s215 + $0x80] sm:$0xff] %v964
      %1019 = vst [vmem:[%s215 + $0x88] sm:$0xff] %v966
      %1020 = vst [vmem:[%s215 + $0x90] sm:$0xff] %v968
      %1021 = vst [vmem:[%s215 + $0x98] sm:$0xff] %v970
      %1022 = vst [vmem:[%s215 + $0xa0] sm:$0xff] %v974
      %1023 = vst [vmem:[%s215 + $0xa8] sm:$0xff] %v976
      %1024 = vst [vmem:[%s215 + $0xb0] sm:$0xff] %v978
      %1025 = vst [vmem:[%s215 + $0xb8] sm:$0xff] %v980
      %1026 = vst [vmem:[%s215 + $0xc0] sm:$0xff] %v984
      %1027 = vst [vmem:[%s215 + $0xc8] sm:$0xff] %v986
      %1028 = vst [vmem:[%s215 + $0xd0] sm:$0xff] %v988
      %1029 = vst [vmem:[%s215 + $0xd8] sm:$0xff] %v990
      %1030 = vst [vmem:[%s215 + $0xe0] sm:$0xff] %v994
      %1031 = vst [vmem:[%s215 + $0xe8] sm:$0xff] %v996
      %1032 = vst [vmem:[%s215 + $0xf0] sm:$0xff] %v998
      %1033 = vst [vmem:[%s215 + $0xf8] sm:$0xff] %v1000
      %s1034 = smul.u32 2, %s26
      %p1035 = scmp.lt.s32.totalorder %s25, 1
      %s1036 = scalar_select %p1035, %s25, 1
      %p1037 = scmp.lt.s32.totalorder %s1034, 1
      %s1038 = scalar_select %p1037, %s1034, 1
      %s1039 = smul.addr %s1036, 32
      %s1040 = sadd.s32 %s1038, %s1039
      %s1041 = smul.addr %s1040, 8
      %s1042 = scalar_lea.vmem %s4, %s1041
      // Predicated region
      $region37: #{cond_conv_forward.1} parent=31 // pred_check
        %p1043 = pneg %p123
      $region38: #{cond_conv_forward.1} parent=31 // pred_check_branch
        %1045 = sbr.rel (%p1043) target = $region40
      $region39: #{cond_conv_forward.1} parent=31 // pred_region
        %s1046 = smul.u32 2, %s26
      $region40: #{cond_conv_forward.1} parent=31 // pred_fallthru
        _
    $region32: #{cond_conv_forward.1} parent=5 // pred_fallthru
      _
    %p1047 = scmp.le.s32.totalorder 2, %s16
    // Predicated region
    $region41: #{cond_conv_forward.1} parent=5 // pred_check
      %p1048 = pneg %p1047
    $region42: #{cond_conv_forward.1} parent=5 // pred_check_branch
      %1050 = sbr.rel (%p1048) target = $region44
    $region43: #{cond_conv_forward.1} parent=5 // pred_region
      %s1051 = ssub.s32 %s16, 2
      // Predicated region
      $region45: #{cond_conv_forward.1} parent=43 // pred_check
        %p1052 = pneg %p129
      $region46: #{cond_conv_forward.1} parent=43 // pred_check_branch
        %1054 = sbr.rel (%p1052) target = $region48
      $region47: #{cond_conv_forward.1} parent=43 // pred_region
        %s1055 = smul.u32 2, %s28
        %p1056 = scmp.lt.s32.totalorder %s27, 1
        %s1057 = scalar_select %p1056, %s27, 1
        %p1058 = scmp.lt.s32.totalorder %s1055, 1
        %s1059 = scalar_select %p1058, %s1055, 1
        %s1060 = smul.addr %s1057, 32
        %s1061 = sadd.s32 %s1059, %s1060
        %s1062 = smul.addr %s1061, 8
        %s1063 = scalar_lea.vmem %s4, %s1062
      $region48: #{cond_conv_forward.1} parent=43 // pred_fallthru
        _
    $region44: #{cond_conv_forward.1} parent=5 // pred_fallthru
      _
  $region6: #{cond_conv_forward.1} parent=0 // loop_footer
    %s20 = sadd.s32 1, %s16
  $region7: #{cond_conv_forward.1} parent=0 // loop_footer_branch
    %15 = sbr.rel target = $region3
  $region8: #{cond_conv_forward.1} parent=0 // loop_exit
    _

</llo_original>
